<compile_context>
chip_gen: v5e
topology: v5e:2x2
jax: 0.10.0
libtpu: 0.0.40
codegen_flags: <defaults>
</compile_context>

<pallas_src>
import functools

import jax
import jax.numpy as jnp
from jax.experimental import pallas as pl
from jax.experimental.pallas import tpu as pltpu

HIDDEN = 128        # SwiGLU output width (fixed by the module)
OUT = 5             # final Linear output width (fixed by the module)


def _cdiv(a, b):
    return -(-a // b)


def _round_down8(x):
    return max(8, (x // 8) * 8)


def _round_up8(x):
    return ((x + 7) // 8) * 8


def _vmem_capacity_bytes():
    try:
        return int(pltpu.get_tpu_info().vmem_capacity_bytes)
    except Exception:
        return 64 << 20     # conservative (v7x-sized) fallback


def _pick_tm(M, D, budget_bytes):
    """Row tile: largest multiple of 8 fitting the VMEM budget, adjusted so a
    large-M grid has an even number of steps >= 4 (v7x megacore balance)."""
    # Per-row bytes: double-buffered x, double-buffered (tm,5) out, h + swiglu.
    per_row = 4 * (2 * D + 2 * OUT + 3 * HIDDEN)
    # Resident weights / biases, double-buffer worst case (8 bytes / element).
    fixed = 8 * (D * 2 * HIDDEN + 2 * HIDDEN + HIDDEN * OUT + OUT)
    tm_cap = max(8, (budget_bytes - fixed) // per_row)
    tm_cap = max(8, min(2048, _round_down8(tm_cap)))

    if M < 8:
        return M                      # block dim == full array dim (legal)
    if M <= tm_cap and M < 1024:
        return M                      # single block; splitting not worth it
    tm = tm_cap
    steps = _cdiv(M, tm)
    if steps < 4 or steps % 2:        # best-effort: even step count >= 4
        steps = max(4, steps + (steps % 2))
        tm = min(tm, _round_up8(_cdiv(M, steps)))
    return tm


def _value_fn_kernel(x_ref, w1_ref, b1_ref, w2_ref, b2_ref, o_ref,
                     *, bf16_matmul=False):
    # x_ref: (tm, D), w1_ref: (D, 2H), b1_ref: (1, 2H)
    # w2_ref: (H, 5), b2_ref: (1, 5), o_ref: (tm, 5)
    x = x_ref[...]
    w1 = w1_ref[...]
    if bf16_matmul:                   # bf16 operands, f32 accumulation (MXU)
        x = x.astype(jnp.bfloat16)
        w1 = w1.astype(jnp.bfloat16)
    h = jnp.dot(x, w1, preferred_element_type=jnp.float32) + b1_ref[...]
    a = h[:, :HIDDEN]                 # value half (lane-tile aligned slice)
    g = h[:, HIDDEN:]                 # gate half
    swiglu = a * (g * jax.nn.sigmoid(g))      # a * silu(g)
    w2 = w2_ref[...]
    if bf16_matmul:
        swiglu = swiglu.astype(jnp.bfloat16)
        w2 = w2.astype(jnp.bfloat16)
    o = jnp.dot(swiglu, w2, preferred_element_type=jnp.float32) + b2_ref[...]
    o_ref[...] = o.astype(o_ref.dtype)


def value_function(embed, params, *, tm=None, use_bf16_matmul=False):
    """embed: (B, L, d_model) -> (B, L-1, 5), matching ValueFunction.forward."""
    w1, b1, w2, b2 = params
    B, L, D = embed.shape

    # Free contiguous reshape; compute all L tokens and drop token 0 on the
    # OUTPUT slice, avoiding an HBM copy of the sliced activations.
    x = embed.reshape(B * L, D)
    M = B * L

    b1_2d = b1.reshape(1, 2 * HIDDEN)     # no-op layout tweaks (cheap)
    b2_2d = b2.reshape(1, OUT)

    vmem_cap = _vmem_capacity_bytes()
    # ~48 MiB tile budget on 128-MiB-VMEM parts (v5e/v6e); ~20 MiB on v7x.
    budget = (48 << 20) if vmem_cap >= (100 << 20) else (20 << 20)
    if tm is None:
        tm = _pick_tm(M, D, budget)
    vmem_limit = min((vmem_cap * 3) // 4, max(32 << 20, budget + (8 << 20)))

    cost = pl.CostEstimate(
        flops=2 * M * D * 2 * HIDDEN + 2 * M * HIDDEN * OUT,
        transcendentals=M * HIDDEN,
        bytes_accessed=4 * (M * D + M * OUT
                            + D * 2 * HIDDEN + 2 * HIDDEN
                            + HIDDEN * OUT + OUT),
    )

    kernel = functools.partial(_value_fn_kernel, bf16_matmul=use_bf16_matmul)

    out = pl.pallas_call(
        kernel,
        out_shape=jax.ShapeDtypeStruct((M, OUT), embed.dtype),
        grid_spec=pltpu.PrefetchScalarGridSpec(
            num_scalar_prefetch=0,
            grid=(pl.cdiv(M, tm),),                              # last block masked
            in_specs=[
                pl.BlockSpec((tm, D), lambda i: (i, 0)),             # x rows tile
                pl.BlockSpec((D, 2 * HIDDEN), lambda i: (0, 0)),     # W1 (resident)
                pl.BlockSpec((1, 2 * HIDDEN), lambda i: (0, 0)),     # b1
                pl.BlockSpec((HIDDEN, OUT), lambda i: (0, 0)),       # W2 (resident)
                pl.BlockSpec((1, OUT), lambda i: (0, 0)),            # b2
            ],
            out_specs=pl.BlockSpec((tm, OUT), lambda i: (i, 0)),     # narrow writeback
        ),
        compiler_params=pltpu.CompilerParams(
            dimension_semantics=("parallel",),
            vmem_limit_bytes=vmem_limit),
        cost_estimate=cost,
    )(x, w1, b1_2d, w2, b2_2d)

    # Single fused post-processing slice: restore (B, L, 5), drop token 0.
    return out.reshape(B, L, OUT)[:, 1:, :]


def _reference(embed, params):
    w1, b1, w2, b2 = params
    x = embed[:, 1:, :]
    h = x @ w1 + b1
    a, g = h[..., :HIDDEN], h[..., HIDDEN:]
    s = a * (g * jax.nn.sigmoid(g))
    return s @ w2 + b2


def init_params(key, d_model):
    k1, k2, k3, k4 = jax.random.split(key, 4)
    # Weights stored as (in, out); equivalent to PyTorch's x @ W.T + b.
    w1 = jax.random.normal(k1, (d_model, 2 * HIDDEN), jnp.float32) * (1.0 / jnp.sqrt(d_model))
    b1 = jax.random.normal(k2, (2 * HIDDEN,), jnp.float32) * 0.01
    w2 = jax.random.normal(k3, (HIDDEN, OUT), jnp.float32) * (1.0 / jnp.sqrt(HIDDEN))
    b2 = jax.random.normal(k4, (OUT,), jnp.float32) * 0.01
    return (w1, b1, w2, b2)


if __name__ == "__main__":
    d_model = 32
    B, L = 2, 9          # embed (2, 9, 32) -> output (2, 8, 5)

    key = jax.random.PRNGKey(0)
    kp, kx = jax.random.split(key)
    params = init_params(kp, d_model)
    embed = jax.random.normal(kx, (B, L, d_model), jnp.float32)

    fn = jax.jit(functools.partial(value_function, params=params))
    out = fn(embed)
    jax.block_until_ready(out)

    ref = _reference(embed, params)
    assert out.shape == (B, L - 1, OUT), out.shape
    assert jnp.allclose(out, ref, atol=1e-4, rtol=1e-4), "mismatch vs reference"

    print("KERNEL_OK")
</pallas_src>

<mosaic_0001>
module attributes {stable_mosaic.version = 11 : i64} {
  func.func @_value_fn_kernel(%arg0: i32, %arg1: memref<18x32xf32, #tpu.memory_space<vmem>>, %arg2: memref<32x256xf32, #tpu.memory_space<vmem>>, %arg3: memref<1x256xf32, #tpu.memory_space<vmem>>, %arg4: memref<128x5xf32, #tpu.memory_space<vmem>>, %arg5: memref<1x5xf32, #tpu.memory_space<vmem>>, %arg6: memref<18x5xf32, #tpu.memory_space<vmem>>) attributes {dimension_semantics = [#tpu.dimension_semantics<parallel>], iteration_bounds = array<i64: 1>, scalar_prefetch = 0 : i64, scratch_operands = 0 : i64, tpu.core_type = #tpu.core_type<tc>, window_params = [{transform_indices = @transform_0, window_bounds = array<i64: 18, 32>}, {pipeline_mode = #tpu.pipeline_mode<synchronous>, transform_indices = @transform_1, window_bounds = array<i64: 32, 256>}, {pipeline_mode = #tpu.pipeline_mode<synchronous>, transform_indices = @transform_2, window_bounds = array<i64: 1, 256>}, {pipeline_mode = #tpu.pipeline_mode<synchronous>, transform_indices = @transform_3, window_bounds = array<i64: 128, 5>}, {pipeline_mode = #tpu.pipeline_mode<synchronous>, transform_indices = @transform_4, window_bounds = array<i64: 1, 5>}, {transform_indices = @transform_5, window_bounds = array<i64: 18, 5>}]} {
    %c0 = arith.constant 0 : index
    %c0_0 = arith.constant 0 : index
    %0 = vector.load %arg1[%c0, %c0_0] : memref<18x32xf32, #tpu.memory_space<vmem>>, vector<18x32xf32>
    %c0_1 = arith.constant 0 : index
    %c0_2 = arith.constant 0 : index
    %1 = vector.load %arg2[%c0_1, %c0_2] : memref<32x256xf32, #tpu.memory_space<vmem>>, vector<32x256xf32>
    %cst = arith.constant dense<0.000000e+00> : vector<18x256xf32>
    %2 = tpu.matmul %0, %1, %cst {dimension_numbers = #tpu.dot_dimension_numbers<[1], [0], [0], [1], [0, 0, 1, 1], [], []>} : vector<18x32xf32>, vector<32x256xf32>, vector<18x256xf32> -> vector<18x256xf32>
    %c0_3 = arith.constant 0 : index
    %c0_4 = arith.constant 0 : index
    %3 = vector.load %arg3[%c0_3, %c0_4] : memref<1x256xf32, #tpu.memory_space<vmem>>, vector<1x256xf32>
    %4 = vector.broadcast %3 : vector<1x256xf32> to vector<18x256xf32>
    %5 = arith.addf %2, %4 : vector<18x256xf32>
    %6 = vector.extract_strided_slice %5 {offsets = [0, 0], sizes = [18, 128], strides = [1, 1]} : vector<18x256xf32> to vector<18x128xf32>
    %7 = vector.extract_strided_slice %5 {offsets = [0, 128], sizes = [18, 128], strides = [1, 1]} : vector<18x256xf32> to vector<18x128xf32>
    %8 = arith.negf %7 : vector<18x128xf32>
    %9 = math.exp %8 : vector<18x128xf32>
    %cst_5 = arith.constant 1.000000e+00 : f32
    %10 = vector.broadcast %cst_5 : f32 to vector<18x128xf32>
    %11 = arith.addf %10, %9 : vector<18x128xf32>
    %12 = arith.divf %10, %11 : vector<18x128xf32>
    %13 = arith.mulf %7, %12 : vector<18x128xf32>
    %14 = arith.mulf %6, %13 : vector<18x128xf32>
    %c0_6 = arith.constant 0 : index
    %c0_7 = arith.constant 0 : index
    %15 = vector.load %arg4[%c0_6, %c0_7] : memref<128x5xf32, #tpu.memory_space<vmem>>, vector<128x5xf32>
    %cst_8 = arith.constant dense<0.000000e+00> : vector<18x5xf32>
    %16 = tpu.matmul %14, %15, %cst_8 {dimension_numbers = #tpu.dot_dimension_numbers<[1], [0], [0], [1], [0, 0, 1, 1], [], []>} : vector<18x128xf32>, vector<128x5xf32>, vector<18x5xf32> -> vector<18x5xf32>
    %c0_9 = arith.constant 0 : index
    %c0_10 = arith.constant 0 : index
    %17 = vector.load %arg5[%c0_9, %c0_10] : memref<1x5xf32, #tpu.memory_space<vmem>>, vector<1x5xf32>
    %18 = vector.broadcast %17 : vector<1x5xf32> to vector<18x5xf32>
    %19 = arith.addf %16, %18 : vector<18x5xf32>
    %c0_11 = arith.constant 0 : index
    %c0_12 = arith.constant 0 : index
    %20 = vector.load %arg6[%c0_11, %c0_12] : memref<18x5xf32, #tpu.memory_space<vmem>>, vector<18x5xf32>
    tpu.vector_store %arg6[%c0_11, %c0_12], %19 {strides = array<i32>} : memref<18x5xf32, #tpu.memory_space<vmem>>, vector<18x5xf32>,
    return
  }
  func.func @transform_0(%arg0: i32) -> (i32, i32) {
    %c0_i32 = arith.constant 0 : i32
    %c0_i32_0 = arith.constant 0 : i32
    return %arg0, %c0_i32 : i32, i32
  }
  func.func @transform_1(%arg0: i32) -> (i32, i32) {
    %c0_i32 = arith.constant 0 : i32
    %c0_i32_0 = arith.constant 0 : i32
    %c0_i32_1 = arith.constant 0 : i32
    return %c0_i32, %c0_i32_0 : i32, i32
  }
  func.func @transform_2(%arg0: i32) -> (i32, i32) {
    %c0_i32 = arith.constant 0 : i32
    %c0_i32_0 = arith.constant 0 : i32
    %c0_i32_1 = arith.constant 0 : i32
    return %c0_i32, %c0_i32_0 : i32, i32
  }
  func.func @transform_3(%arg0: i32) -> (i32, i32) {
    %c0_i32 = arith.constant 0 : i32
    %c0_i32_0 = arith.constant 0 : i32
    %c0_i32_1 = arith.constant 0 : i32
    return %c0_i32, %c0_i32_0 : i32, i32
  }
  func.func @transform_4(%arg0: i32) -> (i32, i32) {
    %c0_i32 = arith.constant 0 : i32
    %c0_i32_0 = arith.constant 0 : i32
    %c0_i32_1 = arith.constant 0 : i32
    return %c0_i32, %c0_i32_0 : i32, i32
  }
  func.func @transform_5(%arg0: i32) -> (i32, i32) {
    %c0_i32 = arith.constant 0 : i32
    %c0_i32_0 = arith.constant 0 : i32
    return %arg0, %c0_i32 : i32, i32
  }
}

</mosaic_0001>

<llo_original>
// kernel: value_function.1
$region0: #{value_function.1}
  #allocation0 [shape = 'u32[]', space=smem, size = 0x4, offset = 0x4, fixed_abs, tag = 'smem constant byte address 0x4 - core index']
  #allocation1 [shape = 'u32[72,128]{1,0:T(1,128)}', space=vmem, size = 0x9000, scoped, tag = 'internal scratch']
  %s0 = inlined_call_operand.vmem [shape: f32[18,32], index: 0, kind: input, shape index: {}]
  %s1 = inlined_call_operand.vmem [shape: f32[32,256], index: 1, kind: input, shape index: {}]
  %s2 = inlined_call_operand.vmem [shape: f32[1,256], index: 2, kind: input, shape index: {}]
  %s3 = inlined_call_operand.hbm [shape: f32[128,5], index: 3, kind: input, shape index: {}]
  %s4 = inlined_call_operand.vmem [shape: f32[1,5], index: 4, kind: input, shape index: {}]
  %s5 = inlined_call_operand.vmem [shape: f32[18,5], index: 5, kind: output, shape index: {}]
  %s6 = sld [smem:[#allocation0]]
  $region34: #{value_function.1} parent=0
    _
  %s8 = ssub.s32 1, %s6
  %s9 = scalar_select 0, %s8, %s6
  $region1: #{value_function.1} parent=0
    #allocation2 [shape = 'u8[65536]{0}', space=vmem, size = 0x10000, scoped, tag = 'input window, operand 3, single buffered']
    #allocation3 [shape = 's32[1]{0}', space=sflag, size = 0x4, scoped, tag = 'scoped memory for value_function.1']
    %10 = vsyncpa [#allocation3], 0
    // Predicated region
    $region2: #{value_function.1} parent=1 // pred_check
      _
    $region3: #{value_function.1} parent=1 // pred_check_branch
      %12 = sbr.rel (0) target = $region5
    $region4: #{value_function.1} parent=1 // pred_region
      _
    $region5: #{value_function.1} parent=1 // pred_fallthru
      _
    // Predicated region
    $region6: #{value_function.1} parent=1 // pred_check
      _
    $region7: #{value_function.1} parent=1 // pred_check_branch
      %14 = sbr.rel (0) target = $region9
    $region8: #{value_function.1} parent=1 // pred_region
      _
    $region9: #{value_function.1} parent=1 // pred_fallthru
      _
    // Predicated region
    $region10: #{value_function.1} parent=1 // pred_check
      _
    $region11: #{value_function.1} parent=1 // pred_check_branch
      %16 = sbr.rel (0) target = $region13
    $region12: #{value_function.1} parent=1 // pred_region
      _
    $region13: #{value_function.1} parent=1 // pred_fallthru
      _
    // Predicated region
    $region14: #{value_function.1} parent=1 // pred_check
      _
    $region15: #{value_function.1} parent=1 // pred_check_branch
      %18 = sbr.rel (0) target = $region17
    $region16: #{value_function.1} parent=1 // pred_region
      %20 = vsyncadd [#allocation3], 0
      %s21 = sshll.u32 %s3, 4
      %s22 = int_to_ptr.hbm [resolvable:$true] %s21
      %s23 = sshll.u32 [#allocation2], 4
      %s24 = int_to_ptr.vmem [resolvable:$true] %s23
      %29 = dma.hbm_to_vmem [thread:$0]  %s22, 2048, %s24, [#allocation3], 128, 128, 8
    $region17: #{value_function.1} parent=1 // pred_fallthru
      _
    // Predicated region
    $region18: #{value_function.1} parent=1 // pred_check
      _
    $region19: #{value_function.1} parent=1 // pred_check_branch
      %31 = sbr.rel (0) target = $region21
    $region20: #{value_function.1} parent=1 // pred_region
      _
    $region21: #{value_function.1} parent=1 // pred_fallthru
      _
    // Predicated region
    $region22: #{value_function.1} parent=1 // pred_check
      _
    $region23: #{value_function.1} parent=1 // pred_check_branch
      %33 = sbr.rel (0) target = $region25
    $region24: #{value_function.1} parent=1 // pred_region
      %35 = dma.done [#allocation3], 2048
    $region25: #{value_function.1} parent=1 // pred_fallthru
      _
    %v36 = vld [vmem:[%s0] sm:$0xff]
    %v37 = vld [vmem:[%s0 + $0x8] sm:$0xff]
    %v38 = vld [vmem:[%s0 + $0x10] sm:$0x3]
    %v39 = vld [vmem:[%s1] sm:$0xff]
    %v40 = vld [vmem:[%s1 + $0x8] sm:$0xff]
    %v41 = vld [vmem:[%s1 + $0x10] sm:$0xff]
    %v42 = vld [vmem:[%s1 + $0x18] sm:$0xff]
    %v43 = vld [vmem:[%s1 + $0x20] sm:$0xff]
    %v44 = vld [vmem:[%s1 + $0x28] sm:$0xff]
    %v45 = vld [vmem:[%s1 + $0x30] sm:$0xff]
    %v46 = vld [vmem:[%s1 + $0x38] sm:$0xff]
    %v47 = vld [vmem:[%s2] sm:$0x3]
    %v49 = vperm.slane %v47, 0
    %v50 = vperm.slane %v47, 1
    %vm53 = vcmask 261120
    %v55 = vsel %vm53, %v36, 0
    %v58 = vsel %vm53, %v37, 0
    %v61 = vsel %vm53, %v38, 0
    %63 = vmatpush.msra.mxu0 0.0
    %64 = vmatpush.msra.mxu0 0.0
    %65 = vmatpush.msra.mxu0 0.0
    %66 = vmatpush.msra.mxu0 0.0
    %67 = vmatpush.msra.mxu0 0.0
    %68 = vmatpush.msra.mxu0 0.0
    %69 = vmatpush.msra.mxu0 0.0
    %70 = vmatpush.msra.mxu0 0.0
    %71 = vmatpush.msra.mxu0 0.0
    %72 = vmatpush.msra.mxu0 0.0
    %73 = vmatpush.msra.mxu0 0.0
    %74 = vmatpush.msra.mxu0 0.0
    %75 = vmatpush.msra.mxu0 %v45
    %76 = vmatpush.msra.mxu0 %v43
    %77 = vmatpush.msra.mxu0 %v41
    %78 = vmatpush.msra.mxu0 %v39
    %79 = vmatmul.f32.gmra.mxu0 %v55
    %v80 = vpop.f32.mrf.mxu0
    %v81 = vadd.f32 %v49, %v80
    %82 = vmatmul.f32.gmra.mxu0 %v58
    %v83 = vpop.f32.mrf.mxu0
    %v84 = vadd.f32 %v49, %v83
    %85 = vmatmul.f32.gmra.mxu0 %v61
    %v86 = vpop.f32.mrf.mxu0
    %v87 = vadd.f32 %v49, %v86
    %88 = vdwg.mxu0
    %89 = vmatpush.msra.mxu0 0.0
    %90 = vmatpush.msra.mxu0 0.0
    %91 = vmatpush.msra.mxu0 0.0
    %92 = vmatpush.msra.mxu0 0.0
    %93 = vmatpush.msra.mxu0 0.0
    %94 = vmatpush.msra.mxu0 0.0
    %95 = vmatpush.msra.mxu0 0.0
    %96 = vmatpush.msra.mxu0 0.0
    %97 = vmatpush.msra.mxu0 0.0
    %98 = vmatpush.msra.mxu0 0.0
    %99 = vmatpush.msra.mxu0 0.0
    %100 = vmatpush.msra.mxu0 0.0
    %101 = vmatpush.msra.mxu0 %v46
    %102 = vmatpush.msra.mxu0 %v44
    %103 = vmatpush.msra.mxu0 %v42
    %104 = vmatpush.msra.mxu0 %v40
    %105 = vmatmul.f32.gmra.mxu0 %v55
    %v106 = vpop.f32.mrf.mxu0
    %v107 = vadd.f32 %v50, %v106
    %108 = vmatmul.f32.gmra.mxu0 %v58
    %v109 = vpop.f32.mrf.mxu0
    %v110 = vadd.f32 %v50, %v109
    %111 = vmatmul.f32.gmra.mxu0 %v61
    %v112 = vpop.f32.mrf.mxu0
    %v113 = vadd.f32 %v50, %v112
    %114 = vdwg.mxu0
    %v115 = vxor.u32 %v107, 2147483648
    %v116 = vxor.u32 %v110, 2147483648
    %v117 = vxor.u32 %v113, 2147483648
    %v118 = vmul.f32 %v115, 1.442695
    %v119 = vpow.pop %v118
    %v120 = vmul.f32 %v116, 1.442695
    %v121 = vpow.pop %v120
    %v122 = vmul.f32 %v117, 1.442695
    %v123 = vpow.pop %v122
    %v124 = vadd.f32 %v119, 1.0
    %v125 = vadd.f32 %v121, 1.0
    %v126 = vadd.f32 %v123, 1.0
    %v127 = vrcp.pop %v124
    %v128 = vmul.f32 %v124, %v127
    %v129 = vsub.f32 1.0, %v128
    %v130 = vmul.f32 %v127, %v129
    %v131 = vadd.f32 %v127, %v130
    %vm132 = vweird.f32 %v124
    %vm133 = vweird.f32 %v127
    %vm134 = vmor %vm132, %vm133
    %v135 = vsel %vm134, %v127, %v131
    %v136 = vand.u32 2147483647, %v124
    %vm137 = vcmp.eq.f32.partialorder %v136, 8.507059e+37
    %v138 = vand.u32 %v124, 2147483648
    %v139 = vor.u32 1.1754944e-38, %v138
    %v140 = vsel %vm137, %v139, %v135
    %v141 = vmul.f32 1.0, %v140
    %v142 = vrcp.pop %v125
    %v143 = vmul.f32 %v125, %v142
    %v144 = vsub.f32 1.0, %v143
    %v145 = vmul.f32 %v142, %v144
    %v146 = vadd.f32 %v142, %v145
    %vm147 = vweird.f32 %v125
    %vm148 = vweird.f32 %v142
    %vm149 = vmor %vm147, %vm148
    %v150 = vsel %vm149, %v142, %v146
    %v151 = vand.u32 2147483647, %v125
    %vm152 = vcmp.eq.f32.partialorder %v151, 8.507059e+37
    %v153 = vand.u32 %v125, 2147483648
    %v154 = vor.u32 1.1754944e-38, %v153
    %v155 = vsel %vm152, %v154, %v150
    %v156 = vmul.f32 1.0, %v155
    %v157 = vrcp.pop %v126
    %v158 = vmul.f32 %v126, %v157
    %v159 = vsub.f32 1.0, %v158
    %v160 = vmul.f32 %v157, %v159
    %v161 = vadd.f32 %v157, %v160
    %vm162 = vweird.f32 %v126
    %vm163 = vweird.f32 %v157
    %vm164 = vmor %vm162, %vm163
    %v165 = vsel %vm164, %v157, %v161
    %v166 = vand.u32 2147483647, %v126
    %vm167 = vcmp.eq.f32.partialorder %v166, 8.507059e+37
    %v168 = vand.u32 %v126, 2147483648
    %v169 = vor.u32 1.1754944e-38, %v168
    %v170 = vsel %vm167, %v169, %v165
    %v171 = vmul.f32 1.0, %v170
    %v172 = vmul.f32 %v107, %v141
    %v173 = vmul.f32 %v110, %v156
    %v174 = vmul.f32 %v113, %v171
    %v175 = vmul.f32 %v81, %v172
    %v176 = vmul.f32 %v84, %v173
    %v177 = vmul.f32 %v87, %v174
    %v178 = vld [vmem:[#allocation2] sm:$0xff]
    %v179 = vld [vmem:[#allocation2 + $0x8] sm:$0xff]
    %v180 = vld [vmem:[#allocation2 + $0x10] sm:$0xff]
    %v181 = vld [vmem:[#allocation2 + $0x18] sm:$0xff]
    %v182 = vld [vmem:[#allocation2 + $0x20] sm:$0xff]
    %v183 = vld [vmem:[#allocation2 + $0x28] sm:$0xff]
    %v184 = vld [vmem:[#allocation2 + $0x30] sm:$0xff]
    %v185 = vld [vmem:[#allocation2 + $0x38] sm:$0xff]
    %v186 = vld [vmem:[#allocation2 + $0x40] sm:$0xff]
    %v187 = vld [vmem:[#allocation2 + $0x48] sm:$0xff]
    %v188 = vld [vmem:[#allocation2 + $0x50] sm:$0xff]
    %v189 = vld [vmem:[#allocation2 + $0x58] sm:$0xff]
    %v190 = vld [vmem:[#allocation2 + $0x60] sm:$0xff]
    %v191 = vld [vmem:[#allocation2 + $0x68] sm:$0xff]
    %v192 = vld [vmem:[#allocation2 + $0x70] sm:$0xff]
    %v193 = vld [vmem:[#allocation2 + $0x78] sm:$0xff]
    %v194 = vld [vmem:[%s4] sm:$0x1]
    %v196 = vperm.slane %v194, 0
    %198 = vmatpush.msra.mxu0 %v193
    %199 = vmatpush.msra.mxu0 %v192
    %200 = vmatpush.msra.mxu0 %v191
    %201 = vmatpush.msra.mxu0 %v190
    %202 = vmatpush.msra.mxu0 %v189
    %203 = vmatpush.msra.mxu0 %v188
    %204 = vmatpush.msra.mxu0 %v187
    %205 = vmatpush.msra.mxu0 %v186
    %206 = vmatpush.msra.mxu0 %v185
    %207 = vmatpush.msra.mxu0 %v184
    %208 = vmatpush.msra.mxu0 %v183
    %209 = vmatpush.msra.mxu0 %v182
    %210 = vmatpush.msra.mxu0 %v181
    %211 = vmatpush.msra.mxu0 %v180
    %212 = vmatpush.msra.mxu0 %v179
    %213 = vmatpush.msra.mxu0 %v178
    %214 = vmatmul.f32.gmra.mxu0 %v175
    %v215 = vpop.f32.mrf.mxu0
    %v216 = vadd.f32 %v196, %v215
    %217 = vmatmul.f32.gmra.mxu0 %v176
    %v218 = vpop.f32.mrf.mxu0
    %v219 = vadd.f32 %v196, %v218
    %220 = vmatmul.f32.gmra.mxu0 %v177
    %v221 = vpop.f32.mrf.mxu0
    %v222 = vadd.f32 %v196, %v221
    %223 = vdwg.mxu0
    %vm224 = vcmask 39936
    %225 = vst.msk [vmem:[%s5] sm:$0xff] %vm224, %v216
    %226 = vst.msk [vmem:[%s5 + $0x8] sm:$0xff] %vm224, %v219
    %vm227 = vcmask 33792
    %228 = vst.msk [vmem:[%s5 + $0x10] sm:$0x3] %vm227, %v222
    // Predicated region
    $region26: #{value_function.1} parent=1 // pred_check
      _
    $region27: #{value_function.1} parent=1 // pred_check_branch
      %230 = sbr.rel (0) target = $region29
    $region28: #{value_function.1} parent=1 // pred_region
      _
    $region29: #{value_function.1} parent=1 // pred_fallthru
      _
    // Predicated region
    $region30: #{value_function.1} parent=1 // pred_check
      _
    $region31: #{value_function.1} parent=1 // pred_check_branch
      %232 = sbr.rel (0) target = $region33
    $region32: #{value_function.1} parent=1 // pred_region
      _
    $region33: #{value_function.1} parent=1 // pred_fallthru
      _
    %233 = vsyncpa [#allocation3], 1

</llo_original>
